<compile_context>
chip_gen: v6e
topology: v6e:2x2x1
jax: 0.10.0
libtpu: 0.0.40
codegen_flags: <defaults>
</compile_context>

<pallas_src>
import numpy as np
import jax
import jax.numpy as jnp
from jax import lax
from jax.experimental import pallas as pl
from jax.experimental.pallas import tpu as pltpu


# ----------------------------------------------------------------------------
# Deterministic synthetic hierarchy (balanced binary tree, depth=3 -> C=8, E=3).
# Reproduces HierarchicalLLLoss.__init__ parameter construction without nltk, and
# additionally emits the compact node-form parameters used by the kernel.
# ----------------------------------------------------------------------------
def build_hierarchy_params(depth: int = 3, alpha: float = 0.5):
    """Returns:
      onehot_num, onehot_den : [C, C, E]  original-module selectors (reference path)
      weights                : [C, E]     edge weights along each leaf->root path
      leaf_to_node           : [C, N+1]   0/1 leaf-under-node indicator; column N = ones (-> Z)
      path_nodes             : [C, E]     node index of the j-th edge on the leaf->root path
      den_nodes              : [C, E]     node whose mass is the denominator of edge j (last -> Z)
    """
    positions = []

    def rec(pos):
        positions.append(pos)
        if len(pos) < depth:
            rec(pos + (0,))
            rec(pos + (1,))

    rec(())
    positions_edges = positions[1:]                       # all non-root nodes (preorder)
    positions_leaves = [p for p in positions if len(p) == depth]
    C = len(positions_leaves)
    E = depth
    N = len(positions_edges)

    idx_edge = {p: i for i, p in enumerate(positions_edges)}
    idx_leaf = {p: i for i, p in enumerate(positions_leaves)}
    edges_from_leaf = [
        [idx_edge[pos[:i]] for i in range(len(pos), 0, -1)] for pos in positions_leaves
    ]

    def leaves_under(pos):
        return [idx_leaf[l] for l in positions_leaves if l[: len(pos)] == pos]

    # deterministic edge weight: exp(-alpha * (depth_of_node - 1)), HXE-style
    edge_weight = {p: float(np.exp(-alpha * (len(p) - 1))) for p in positions_edges}

    # --- original-module parameterization (used by the pure-JAX reference) ---
    onehot_num = np.zeros((C, C, E), np.float32)
    onehot_den = np.zeros((C, C, E), np.float32)
    weights = np.zeros((C, E), np.float32)
    for i in range(C):
        ef = edges_from_leaf[i]
        for j, k in enumerate(ef):
            onehot_num[i, leaves_under(positions_edges[k]), j] = 1.0
            weights[i, j] = edge_weight[positions_edges[k]]
        for j, k in enumerate(ef[1:]):
            onehot_den[i, leaves_under(positions_edges[k]), j] = 1.0
        onehot_den[i, :, len(ef) - 1] = 1.0

    # --- compact node parameterization (used by the kernel) ---
    leaf_to_node = np.zeros((C, N + 1), np.float32)
    for k, pos in enumerate(positions_edges):
        leaf_to_node[leaves_under(pos), k] = 1.0
    leaf_to_node[:, N] = 1.0                              # virtual root column -> Z

    path_nodes = np.zeros((C, E), np.float32)
    den_nodes = np.zeros((C, E), np.float32)
    for i in range(C):
        ef = edges_from_leaf[i]
        for j, k in enumerate(ef):
            path_nodes[i, j] = k
            den_nodes[i, j] = ef[j + 1] if j + 1 < len(ef) else N

    return onehot_num, onehot_den, weights, leaf_to_node, path_nodes, den_nodes


# ----------------------------------------------------------------------------
# Kernel: per batch tile ->
#   ex = exp(logits - rowmax)  (unnormalized; Z cancels in num/den)
#   node_sums = ex @ leaf_to_node            (ONE matmul; last column = Z)
#   per-target metadata rows via one-hot MXU gather
#   per edge: lane-mask select num/den node sums, term = log(den) - log(num) if num != 0
#   per-sample loss vector written out; mean taken in the wrapper.
# ----------------------------------------------------------------------------
def hxe_loss_kernel(logits_ref, tgt_ref, l2n_ref, meta_ref, out_ref):
    TB, C = logits_ref.shape
    NP1 = l2n_ref.shape[1]
    E = meta_ref.shape[1] // 3

    logits = logits_ref[...].astype(jnp.float32)                 # [TB, C]
    m = jnp.max(logits, axis=1, keepdims=True)
    ex = jnp.exp(logits - m)                                     # unnormalized softmax numerators

    # all ancestor-node probability masses in one matmul (bf16 0/1 indicator -> exact f32)
    l2n = l2n_ref[...].astype(jnp.float32)                       # [C, N+1]
    node_sums = jnp.dot(ex, l2n, preferred_element_type=jnp.float32)   # [TB, N+1]

    # gather per-target metadata rows (num node id, den node id, edge weight) via one-hot matmul
    tgt = tgt_ref[...]                                           # [TB, 1] int32
    cls = lax.broadcasted_iota(jnp.int32, (TB, C), 1)
    t_oh = (cls == tgt).astype(jnp.float32)                      # [TB, C]
    meta_rows = jnp.dot(t_oh, meta_ref[...], preferred_element_type=jnp.float32)  # [TB, 3E]

    node_ids = lax.broadcasted_iota(jnp.int32, (TB, NP1), 1).astype(jnp.float32)

    loss_vec = jnp.zeros((TB, 1), jnp.float32)
    for j in range(E):                                           # static loop; E is small
        n_idx = meta_rows[:, j:j + 1]                            # [TB, 1] numerator node id
        d_idx = meta_rows[:, E + j:E + j + 1]                    # [TB, 1] denominator node id
        w_j = meta_rows[:, 2 * E + j:2 * E + j + 1]              # [TB, 1] edge weight
        num_j = jnp.sum(jnp.where(jnp.abs(node_ids - n_idx) < 0.5, node_sums, 0.0),
                        axis=1, keepdims=True)                   # [TB, 1]
        den_j = jnp.sum(jnp.where(jnp.abs(node_ids - d_idx) < 0.5, node_sums, 0.0),
                        axis=1, keepdims=True)                   # [TB, 1]
        safe_num = jnp.where(num_j > 0.0, num_j, 1.0)
        safe_den = jnp.where(den_j > 0.0, den_j, 1.0)
        term_j = jnp.where(num_j != 0.0, jnp.log(safe_den) - jnp.log(safe_num), 0.0)
        # flip over the edge axis in the reference is a no-op under the sum
        loss_vec = loss_vec + w_j * term_j

    out_ref[...] = loss_vec


def hierarchical_cross_entropy_loss(logits, target, leaf_to_node, path_nodes, den_nodes,
                                    weights, *, tile_b=8):
    B, C = logits.shape
    E = int(weights.shape[1])
    NP1 = int(leaf_to_node.shape[1])

    # pack the tiny per-class metadata into one [C, 3E] f32 table (small integer ids are exact)
    meta = jnp.concatenate([jnp.asarray(path_nodes, jnp.float32),
                            jnp.asarray(den_nodes, jnp.float32),
                            jnp.asarray(weights, jnp.float32)], axis=1)
    l2n_bf16 = jnp.asarray(leaf_to_node, jnp.bfloat16)           # 0/1 is exact in bf16

    # pad batch to a multiple of the batch tile (padded rows discarded before the mean)
    b_pad = ((B + tile_b - 1) // tile_b) * tile_b
    if b_pad != B:
        logits = jnp.pad(logits, ((0, b_pad - B), (0, 0)))
        target = jnp.pad(target, (0, b_pad - B))
    tgt2d = target.astype(jnp.int32).reshape(b_pad, 1)

    per_sample = pl.pallas_call(
        hxe_loss_kernel,
        out_shape=jax.ShapeDtypeStruct((b_pad, 1), jnp.float32),
        grid_spec=pltpu.PrefetchScalarGridSpec(
            num_scalar_prefetch=0,
            grid=(b_pad // tile_b,),
            in_specs=[
                pl.BlockSpec((tile_b, C), lambda i: (i, 0)),     # logits, streamed per batch tile
                pl.BlockSpec((tile_b, 1), lambda i: (i, 0)),     # targets
                pl.BlockSpec((C, NP1), lambda i: (0, 0)),        # leaf->node indicator (resident)
                pl.BlockSpec((C, 3 * E), lambda i: (0, 0)),      # per-class metadata (resident)
            ],
            out_specs=pl.BlockSpec((tile_b, 1), lambda i: (i, 0)),
        ),
        compiler_params=pltpu.CompilerParams(
            # batch tiles are independent -> shardable across v7x's two TensorCores
            dimension_semantics=("parallel",),
            # NOTE: at realistic sizes (tile_b=128..512, C a multiple of 128) also set
            # vmem_limit_bytes from the double-buffered footprint (v5e/v6e scoped defaults
            # are 16/32 MiB; keep the per-step resident set < ~32 MiB for v7x's 64 MiB VMEM).
        ),
    )(logits, tgt2d, l2n_bf16, meta)

    # mean over the real (unpadded) batch; per-tile partials are reduced outside the kernel
    return jnp.mean(per_sample[:B, 0])


# pure-JAX reference (mirrors the PyTorch forward exactly) for the correctness check
def reference_loss(logits, target, onehot_num, onehot_den, weights):
    p = jax.nn.softmax(logits, axis=1)                           # [B, C]
    num = jnp.sum(p[:, :, None] * onehot_num[target], axis=1)    # [B, E]
    den = jnp.sum(p[:, :, None] * onehot_den[target], axis=1)    # [B, E]
    safe_den = jnp.where(den == 0.0, 1.0, den)
    term = jnp.where(num != 0.0, -jnp.log(num / safe_den), 0.0)
    per = jnp.sum(jnp.flip(weights[target] * term, axis=1), axis=1)
    return jnp.mean(per)


if __name__ == "__main__":
    # synthetic hierarchy: 8 leaf classes, 3 edges on each leaf->root path
    (onehot_num_np, onehot_den_np, weights_np,
     leaf_to_node_np, path_nodes_np, den_nodes_np) = build_hierarchy_params(depth=3)
    C = onehot_num_np.shape[0]
    B = 16                                                       # two batch tiles of 8

    key = jax.random.PRNGKey(0)
    k1, k2 = jax.random.split(key)
    logits = jax.random.normal(k1, (B, C), dtype=jnp.float32)
    target = jax.random.randint(k2, (B,), 0, C, dtype=jnp.int32)

    loss = hierarchical_cross_entropy_loss(
        logits, target, leaf_to_node_np, path_nodes_np, den_nodes_np, weights_np, tile_b=8)
    loss = jax.block_until_ready(loss)

    ref = reference_loss(logits, target,
                         jnp.asarray(onehot_num_np), jnp.asarray(onehot_den_np),
                         jnp.asarray(weights_np))
    np.testing.assert_allclose(np.asarray(loss), np.asarray(ref), rtol=1e-5, atol=1e-5)

    print("KERNEL_OK")
</pallas_src>

<mosaic_0001>
module attributes {stable_mosaic.version = 11 : i64} {
  func.func @hxe_loss_kernel(%arg0: i32, %arg1: memref<8x8xf32, #tpu.memory_space<vmem>>, %arg2: memref<8x1xi32, #tpu.memory_space<vmem>>, %arg3: memref<8x15xbf16, #tpu.memory_space<vmem>>, %arg4: memref<8x9xf32, #tpu.memory_space<vmem>>, %arg5: memref<8x1xf32, #tpu.memory_space<vmem>>) attributes {dimension_semantics = [#tpu.dimension_semantics<parallel>], iteration_bounds = array<i64: 2>, scalar_prefetch = 0 : i64, scratch_operands = 0 : i64, tpu.core_type = #tpu.core_type<tc>, window_params = [{transform_indices = @transform_0, window_bounds = array<i64: 8, 8>}, {transform_indices = @transform_1, window_bounds = array<i64: 8, 1>}, {pipeline_mode = #tpu.pipeline_mode<synchronous>, transform_indices = @transform_2, window_bounds = array<i64: 8, 15>}, {pipeline_mode = #tpu.pipeline_mode<synchronous>, transform_indices = @transform_3, window_bounds = array<i64: 8, 9>}, {transform_indices = @transform_4, window_bounds = array<i64: 8, 1>}]} {
    %c0 = arith.constant 0 : index
    %c0_0 = arith.constant 0 : index
    %0 = vector.load %arg1[%c0, %c0_0] : memref<8x8xf32, #tpu.memory_space<vmem>>, vector<8x8xf32>
    %cst = arith.constant dense<0xFF800000> : vector<8xf32>
    %1 = vector.multi_reduction <maximumf>, %0, %cst [1] : vector<8x8xf32> to vector<8xf32>
    %2 = vector.shape_cast %1 : vector<8xf32> to vector<8x1xf32>
    %3 = vector.broadcast %2 : vector<8x1xf32> to vector<8x8xf32>
    %4 = arith.subf %0, %3 : vector<8x8xf32>
    %5 = math.exp %4 : vector<8x8xf32>
    %c0_1 = arith.constant 0 : index
    %c0_2 = arith.constant 0 : index
    %6 = vector.load %arg3[%c0_1, %c0_2] : memref<8x15xbf16, #tpu.memory_space<vmem>>, vector<8x15xbf16>
    %7 = arith.extf %6 : vector<8x15xbf16> to vector<8x15xf32>
    %cst_3 = arith.constant dense<0.000000e+00> : vector<8x15xf32>
    %8 = tpu.matmul %5, %7, %cst_3 {dimension_numbers = #tpu.dot_dimension_numbers<[1], [0], [0], [1], [0, 0, 1, 1], [], []>} : vector<8x8xf32>, vector<8x15xf32>, vector<8x15xf32> -> vector<8x15xf32>
    %c0_4 = arith.constant 0 : index
    %c0_5 = arith.constant 0 : index
    %9 = vector.load %arg2[%c0_4, %c0_5] : memref<8x1xi32, #tpu.memory_space<vmem>>, vector<8x1xi32>
    %10 = tpu.iota {dimensions = array<i32: 1>} : vector<8x8xi32>
    %11 = vector.broadcast %9 : vector<8x1xi32> to vector<8x8xi32>
    %12 = arith.cmpi eq, %10, %11 : vector<8x8xi32>
    %13 = arith.extui %12 : vector<8x8xi1> to vector<8x8xi32>
    %14 = arith.sitofp %13 : vector<8x8xi32> to vector<8x8xf32>
    %c0_6 = arith.constant 0 : index
    %c0_7 = arith.constant 0 : index
    %15 = vector.load %arg4[%c0_6, %c0_7] : memref<8x9xf32, #tpu.memory_space<vmem>>, vector<8x9xf32>
    %cst_8 = arith.constant dense<0.000000e+00> : vector<8x9xf32>
    %16 = tpu.matmul %14, %15, %cst_8 {dimension_numbers = #tpu.dot_dimension_numbers<[1], [0], [0], [1], [0, 0, 1, 1], [], []>} : vector<8x8xf32>, vector<8x9xf32>, vector<8x9xf32> -> vector<8x9xf32>
    %17 = tpu.iota {dimensions = array<i32: 1>} : vector<8x15xi32>
    %18 = arith.sitofp %17 : vector<8x15xi32> to vector<8x15xf32>
    %cst_9 = arith.constant 0.000000e+00 : f32
    %19 = vector.broadcast %cst_9 : f32 to vector<8x1xf32>
    %20 = vector.extract_strided_slice %16 {offsets = [0, 0], sizes = [8, 1], strides = [1, 1]} : vector<8x9xf32> to vector<8x1xf32>
    %21 = vector.extract_strided_slice %16 {offsets = [0, 3], sizes = [8, 1], strides = [1, 1]} : vector<8x9xf32> to vector<8x1xf32>
    %22 = vector.extract_strided_slice %16 {offsets = [0, 6], sizes = [8, 1], strides = [1, 1]} : vector<8x9xf32> to vector<8x1xf32>
    %23 = vector.broadcast %20 : vector<8x1xf32> to vector<8x15xf32>
    %24 = arith.subf %18, %23 : vector<8x15xf32>
    %25 = math.absf %24 : vector<8x15xf32>
    %cst_10 = arith.constant 5.000000e-01 : f32
    %26 = vector.broadcast %cst_10 : f32 to vector<8x15xf32>
    %27 = arith.cmpf olt, %25, %26 : vector<8x15xf32>
    %cst_11 = arith.constant 0.000000e+00 : f32
    %28 = vector.broadcast %cst_11 : f32 to vector<8x15xf32>
    %29 = arith.select %27, %8, %28 : vector<8x15xi1>, vector<8x15xf32>
    %cst_12 = arith.constant dense<0.000000e+00> : vector<8xf32>
    %30 = vector.multi_reduction <add>, %29, %cst_12 [1] : vector<8x15xf32> to vector<8xf32>
    %31 = vector.shape_cast %30 : vector<8xf32> to vector<8x1xf32>
    %32 = vector.broadcast %21 : vector<8x1xf32> to vector<8x15xf32>
    %33 = arith.subf %18, %32 : vector<8x15xf32>
    %34 = math.absf %33 : vector<8x15xf32>
    %cst_13 = arith.constant 5.000000e-01 : f32
    %35 = vector.broadcast %cst_13 : f32 to vector<8x15xf32>
    %36 = arith.cmpf olt, %34, %35 : vector<8x15xf32>
    %cst_14 = arith.constant 0.000000e+00 : f32
    %37 = vector.broadcast %cst_14 : f32 to vector<8x15xf32>
    %38 = arith.select %36, %8, %37 : vector<8x15xi1>, vector<8x15xf32>
    %cst_15 = arith.constant dense<0.000000e+00> : vector<8xf32>
    %39 = vector.multi_reduction <add>, %38, %cst_15 [1] : vector<8x15xf32> to vector<8xf32>
    %40 = vector.shape_cast %39 : vector<8xf32> to vector<8x1xf32>
    %cst_16 = arith.constant 0.000000e+00 : f32
    %41 = vector.broadcast %cst_16 : f32 to vector<8x1xf32>
    %42 = arith.cmpf ogt, %31, %41 : vector<8x1xf32>
    %cst_17 = arith.constant 1.000000e+00 : f32
    %43 = vector.broadcast %cst_17 : f32 to vector<8x1xf32>
    %44 = arith.select %42, %31, %43 : vector<8x1xi1>, vector<8x1xf32>
    %cst_18 = arith.constant 0.000000e+00 : f32
    %45 = vector.broadcast %cst_18 : f32 to vector<8x1xf32>
    %46 = arith.cmpf ogt, %40, %45 : vector<8x1xf32>
    %cst_19 = arith.constant 1.000000e+00 : f32
    %47 = vector.broadcast %cst_19 : f32 to vector<8x1xf32>
    %48 = arith.select %46, %40, %47 : vector<8x1xi1>, vector<8x1xf32>
    %cst_20 = arith.constant 0.000000e+00 : f32
    %49 = vector.broadcast %cst_20 : f32 to vector<8x1xf32>
    %50 = arith.cmpf one, %31, %49 : vector<8x1xf32>
    %51 = math.log %48 : vector<8x1xf32>
    %52 = math.log %44 : vector<8x1xf32>
    %53 = arith.subf %51, %52 : vector<8x1xf32>
    %cst_21 = arith.constant 0.000000e+00 : f32
    %54 = vector.broadcast %cst_21 : f32 to vector<8x1xf32>
    %55 = arith.select %50, %53, %54 : vector<8x1xi1>, vector<8x1xf32>
    %56 = arith.mulf %22, %55 : vector<8x1xf32>
    %57 = arith.addf %19, %56 : vector<8x1xf32>
    %58 = vector.extract_strided_slice %16 {offsets = [0, 1], sizes = [8, 1], strides = [1, 1]} : vector<8x9xf32> to vector<8x1xf32>
    %59 = vector.extract_strided_slice %16 {offsets = [0, 4], sizes = [8, 1], strides = [1, 1]} : vector<8x9xf32> to vector<8x1xf32>
    %60 = vector.extract_strided_slice %16 {offsets = [0, 7], sizes = [8, 1], strides = [1, 1]} : vector<8x9xf32> to vector<8x1xf32>
    %61 = vector.broadcast %58 : vector<8x1xf32> to vector<8x15xf32>
    %62 = arith.subf %18, %61 : vector<8x15xf32>
    %63 = math.absf %62 : vector<8x15xf32>
    %cst_22 = arith.constant 5.000000e-01 : f32
    %64 = vector.broadcast %cst_22 : f32 to vector<8x15xf32>
    %65 = arith.cmpf olt, %63, %64 : vector<8x15xf32>
    %cst_23 = arith.constant 0.000000e+00 : f32
    %66 = vector.broadcast %cst_23 : f32 to vector<8x15xf32>
    %67 = arith.select %65, %8, %66 : vector<8x15xi1>, vector<8x15xf32>
    %cst_24 = arith.constant dense<0.000000e+00> : vector<8xf32>
    %68 = vector.multi_reduction <add>, %67, %cst_24 [1] : vector<8x15xf32> to vector<8xf32>
    %69 = vector.shape_cast %68 : vector<8xf32> to vector<8x1xf32>
    %70 = vector.broadcast %59 : vector<8x1xf32> to vector<8x15xf32>
    %71 = arith.subf %18, %70 : vector<8x15xf32>
    %72 = math.absf %71 : vector<8x15xf32>
    %cst_25 = arith.constant 5.000000e-01 : f32
    %73 = vector.broadcast %cst_25 : f32 to vector<8x15xf32>
    %74 = arith.cmpf olt, %72, %73 : vector<8x15xf32>
    %cst_26 = arith.constant 0.000000e+00 : f32
    %75 = vector.broadcast %cst_26 : f32 to vector<8x15xf32>
    %76 = arith.select %74, %8, %75 : vector<8x15xi1>, vector<8x15xf32>
    %cst_27 = arith.constant dense<0.000000e+00> : vector<8xf32>
    %77 = vector.multi_reduction <add>, %76, %cst_27 [1] : vector<8x15xf32> to vector<8xf32>
    %78 = vector.shape_cast %77 : vector<8xf32> to vector<8x1xf32>
    %cst_28 = arith.constant 0.000000e+00 : f32
    %79 = vector.broadcast %cst_28 : f32 to vector<8x1xf32>
    %80 = arith.cmpf ogt, %69, %79 : vector<8x1xf32>
    %cst_29 = arith.constant 1.000000e+00 : f32
    %81 = vector.broadcast %cst_29 : f32 to vector<8x1xf32>
    %82 = arith.select %80, %69, %81 : vector<8x1xi1>, vector<8x1xf32>
    %cst_30 = arith.constant 0.000000e+00 : f32
    %83 = vector.broadcast %cst_30 : f32 to vector<8x1xf32>
    %84 = arith.cmpf ogt, %78, %83 : vector<8x1xf32>
    %cst_31 = arith.constant 1.000000e+00 : f32
    %85 = vector.broadcast %cst_31 : f32 to vector<8x1xf32>
    %86 = arith.select %84, %78, %85 : vector<8x1xi1>, vector<8x1xf32>
    %cst_32 = arith.constant 0.000000e+00 : f32
    %87 = vector.broadcast %cst_32 : f32 to vector<8x1xf32>
    %88 = arith.cmpf one, %69, %87 : vector<8x1xf32>
    %89 = math.log %86 : vector<8x1xf32>
    %90 = math.log %82 : vector<8x1xf32>
    %91 = arith.subf %89, %90 : vector<8x1xf32>
    %cst_33 = arith.constant 0.000000e+00 : f32
    %92 = vector.broadcast %cst_33 : f32 to vector<8x1xf32>
    %93 = arith.select %88, %91, %92 : vector<8x1xi1>, vector<8x1xf32>
    %94 = arith.mulf %60, %93 : vector<8x1xf32>
    %95 = arith.addf %57, %94 : vector<8x1xf32>
    %96 = vector.extract_strided_slice %16 {offsets = [0, 2], sizes = [8, 1], strides = [1, 1]} : vector<8x9xf32> to vector<8x1xf32>
    %97 = vector.extract_strided_slice %16 {offsets = [0, 5], sizes = [8, 1], strides = [1, 1]} : vector<8x9xf32> to vector<8x1xf32>
    %98 = vector.extract_strided_slice %16 {offsets = [0, 8], sizes = [8, 1], strides = [1, 1]} : vector<8x9xf32> to vector<8x1xf32>
    %99 = vector.broadcast %96 : vector<8x1xf32> to vector<8x15xf32>
    %100 = arith.subf %18, %99 : vector<8x15xf32>
    %101 = math.absf %100 : vector<8x15xf32>
    %cst_34 = arith.constant 5.000000e-01 : f32
    %102 = vector.broadcast %cst_34 : f32 to vector<8x15xf32>
    %103 = arith.cmpf olt, %101, %102 : vector<8x15xf32>
    %cst_35 = arith.constant 0.000000e+00 : f32
    %104 = vector.broadcast %cst_35 : f32 to vector<8x15xf32>
    %105 = arith.select %103, %8, %104 : vector<8x15xi1>, vector<8x15xf32>
    %cst_36 = arith.constant dense<0.000000e+00> : vector<8xf32>
    %106 = vector.multi_reduction <add>, %105, %cst_36 [1] : vector<8x15xf32> to vector<8xf32>
    %107 = vector.shape_cast %106 : vector<8xf32> to vector<8x1xf32>
    %108 = vector.broadcast %97 : vector<8x1xf32> to vector<8x15xf32>
    %109 = arith.subf %18, %108 : vector<8x15xf32>
    %110 = math.absf %109 : vector<8x15xf32>
    %cst_37 = arith.constant 5.000000e-01 : f32
    %111 = vector.broadcast %cst_37 : f32 to vector<8x15xf32>
    %112 = arith.cmpf olt, %110, %111 : vector<8x15xf32>
    %cst_38 = arith.constant 0.000000e+00 : f32
    %113 = vector.broadcast %cst_38 : f32 to vector<8x15xf32>
    %114 = arith.select %112, %8, %113 : vector<8x15xi1>, vector<8x15xf32>
    %cst_39 = arith.constant dense<0.000000e+00> : vector<8xf32>
    %115 = vector.multi_reduction <add>, %114, %cst_39 [1] : vector<8x15xf32> to vector<8xf32>
    %116 = vector.shape_cast %115 : vector<8xf32> to vector<8x1xf32>
    %cst_40 = arith.constant 0.000000e+00 : f32
    %117 = vector.broadcast %cst_40 : f32 to vector<8x1xf32>
    %118 = arith.cmpf ogt, %107, %117 : vector<8x1xf32>
    %cst_41 = arith.constant 1.000000e+00 : f32
    %119 = vector.broadcast %cst_41 : f32 to vector<8x1xf32>
    %120 = arith.select %118, %107, %119 : vector<8x1xi1>, vector<8x1xf32>
    %cst_42 = arith.constant 0.000000e+00 : f32
    %121 = vector.broadcast %cst_42 : f32 to vector<8x1xf32>
    %122 = arith.cmpf ogt, %116, %121 : vector<8x1xf32>
    %cst_43 = arith.constant 1.000000e+00 : f32
    %123 = vector.broadcast %cst_43 : f32 to vector<8x1xf32>
    %124 = arith.select %122, %116, %123 : vector<8x1xi1>, vector<8x1xf32>
    %cst_44 = arith.constant 0.000000e+00 : f32
    %125 = vector.broadcast %cst_44 : f32 to vector<8x1xf32>
    %126 = arith.cmpf one, %107, %125 : vector<8x1xf32>
    %127 = math.log %124 : vector<8x1xf32>
    %128 = math.log %120 : vector<8x1xf32>
    %129 = arith.subf %127, %128 : vector<8x1xf32>
    %cst_45 = arith.constant 0.000000e+00 : f32
    %130 = vector.broadcast %cst_45 : f32 to vector<8x1xf32>
    %131 = arith.select %126, %129, %130 : vector<8x1xi1>, vector<8x1xf32>
    %132 = arith.mulf %98, %131 : vector<8x1xf32>
    %133 = arith.addf %95, %132 : vector<8x1xf32>
    %c0_46 = arith.constant 0 : index
    %c0_47 = arith.constant 0 : index
    %134 = vector.load %arg5[%c0_46, %c0_47] : memref<8x1xf32, #tpu.memory_space<vmem>>, vector<8x1xf32>
    tpu.vector_store %arg5[%c0_46, %c0_47], %133 {strides = array<i32>} : memref<8x1xf32, #tpu.memory_space<vmem>>, vector<8x1xf32>,
    return
  }
  func.func @transform_0(%arg0: i32) -> (i32, i32) {
    %c0_i32 = arith.constant 0 : i32
    %c0_i32_0 = arith.constant 0 : i32
    return %arg0, %c0_i32 : i32, i32
  }
  func.func @transform_1(%arg0: i32) -> (i32, i32) {
    %c0_i32 = arith.constant 0 : i32
    %c0_i32_0 = arith.constant 0 : i32
    return %arg0, %c0_i32 : i32, i32
  }
  func.func @transform_2(%arg0: i32) -> (i32, i32) {
    %c0_i32 = arith.constant 0 : i32
    %c0_i32_0 = arith.constant 0 : i32
    %c0_i32_1 = arith.constant 0 : i32
    return %c0_i32, %c0_i32_0 : i32, i32
  }
  func.func @transform_3(%arg0: i32) -> (i32, i32) {
    %c0_i32 = arith.constant 0 : i32
    %c0_i32_0 = arith.constant 0 : i32
    %c0_i32_1 = arith.constant 0 : i32
    return %c0_i32, %c0_i32_0 : i32, i32
  }
  func.func @transform_4(%arg0: i32) -> (i32, i32) {
    %c0_i32 = arith.constant 0 : i32
    %c0_i32_0 = arith.constant 0 : i32
    return %arg0, %c0_i32 : i32, i32
  }
}

</mosaic_0001>

<llo_original>
// kernel: tpu_custom_call.1
$region0: #{tpu_custom_call.1}
  #allocation0 [shape = 'u32[]', space=smem, size = 0x4, offset = 0x4, fixed_abs, tag = 'smem constant byte address 0x4 - core index']
  #allocation1 [shape = 'u32[144,128]{1,0:T(1,128)}', space=vmem, size = 0x12000, scoped, tag = 'internal scratch']
  %s0 = inlined_call_operand.vmem [shape: f32[16,8], index: 0, kind: input, shape index: {}]
  %s1 = inlined_call_operand.vmem [shape: s32[16,1], index: 1, kind: input, shape index: {}]
  %s2 = inlined_call_operand.vmem [shape: bf16[8,15], index: 2, kind: input, shape index: {}]
  %s3 = inlined_call_operand.vmem [shape: f32[8,9], index: 3, kind: input, shape index: {}]
  %s4 = inlined_call_operand.vmem [shape: f32[16,1], index: 4, kind: output, shape index: {}]
  %s5 = sld [smem:[#allocation0]]
  $region49: #{tpu_custom_call.1} parent=0
    _
  %s7 = ssub.s32 1, %s5
  %s8 = scalar_select 0, %s7, %s5
  loop: start=0, step=1, limit=4
  $region2: #{tpu_custom_call.1} parent=0 // loop_pre_header
    _
  $region3: #{tpu_custom_call.1} parent=0 // loop_header
    %s10 = sphi 0, %s14
    %p11 = scmp.ge.s32.totalorder %s10, 4
    %s20 = sphi 0, %s22
    %s23 = sphi 0, %s20
    %s24 = sphi 0, %s23
    %s40 = sphi 0, %s24
    %s46 = sphi 0, %s48
    %s49 = sphi 0, %s46
    %s50 = sphi 0, %s49
    %s66 = sphi 0, %s50
    %s70 = sphi 0, %s70
    %s72 = sphi 0, %s70
    %s73 = sphi 0, %s72
    %s87 = sphi 0, %s73
    %s91 = sphi 0, %s91
    %s93 = sphi 0, %s91
    %s94 = sphi 0, %s93
    %s108 = sphi 0, %s94
    %s114 = sphi 0, %s116
    %s117 = sphi 0, %s114
    %s118 = sphi 0, %s117
    %s134 = sphi 0, %s118
  $region4: #{tpu_custom_call.1} parent=0 // loop_header_branch
    %13 = sbr.rel (%p11) target = $region8
  $region5: #{tpu_custom_call.1} parent=0 // loop_body
    %s15 = ssub.s32 %s10, 1
    %s16 = ssub.s32 %s10, 2
    %s17 = sadd.s32 %s10, 1
    %s18 = ssub.s32 %s10, %s17
    %p19 = scmp.eq.s32.totalorder %s18, 0
    %s21 = sadd.s32 %s20, 1
    %s22 = scalar_select %p19, %s20, %s21
    %p25 = pneg %p19
    %p26 = scmp.eq.s32.totalorder %s10, 1
    %p27 = por %p25, %p26
    %p28 = scmp.ne.s32.totalorder %s20, %s23
    %p29 = scmp.eq.s32.totalorder %s10, 0
    %p30 = por %p28, %p29
    %p31 = scmp.ne.s32.totalorder %s20, %s23
    %p32 = scmp.eq.s32.totalorder %s15, 1
    %p33 = por %p31, %p32
    %p34 = scmp.ne.s32.totalorder %s23, %s24
    %p35 = scmp.eq.s32.totalorder %s15, 0
    %p36 = por %p34, %p35
    %p37 = scmp.ne.s32.totalorder %s23, %s24
    %p38 = scmp.eq.s32.totalorder %s16, 1
    %p39 = por %p37, %p38
    %p41 = scmp.ne.s32.totalorder %s24, %s40
    %p42 = scmp.eq.s32.totalorder %s16, 0
    %p43 = por %p41, %p42
    %s44 = ssub.s32 %s10, %s17
    %p45 = scmp.eq.s32.totalorder %s44, 0
    %s47 = sadd.s32 %s46, 1
    %s48 = scalar_select %p45, %s46, %s47
    %p51 = pneg %p45
    %p52 = scmp.eq.s32.totalorder %s10, 1
    %p53 = por %p51, %p52
    %p54 = scmp.ne.s32.totalorder %s46, %s49
    %p55 = scmp.eq.s32.totalorder %s10, 0
    %p56 = por %p54, %p55
    %p57 = scmp.ne.s32.totalorder %s46, %s49
    %p58 = scmp.eq.s32.totalorder %s15, 1
    %p59 = por %p57, %p58
    %p60 = scmp.ne.s32.totalorder %s49, %s50
    %p61 = scmp.eq.s32.totalorder %s15, 0
    %p62 = por %p60, %p61
    %p63 = scmp.ne.s32.totalorder %s49, %s50
    %p64 = scmp.eq.s32.totalorder %s16, 1
    %p65 = por %p63, %p64
    %p67 = scmp.ne.s32.totalorder %s50, %s66
    %p68 = scmp.eq.s32.totalorder %s16, 0
    %p69 = por %p67, %p68
    %s71 = sadd.s32 %s70, 1
    %p74 = scmp.eq.s32.totalorder %s10, 1
    %p75 = scmp.ne.s32.totalorder %s70, %s72
    %p76 = scmp.eq.s32.totalorder %s10, 0
    %p77 = por %p75, %p76
    %p78 = scmp.ne.s32.totalorder %s70, %s72
    %p79 = scmp.eq.s32.totalorder %s15, 1
    %p80 = por %p78, %p79
    %p81 = scmp.ne.s32.totalorder %s72, %s73
    %p82 = scmp.eq.s32.totalorder %s15, 0
    %p83 = por %p81, %p82
    %p84 = scmp.ne.s32.totalorder %s72, %s73
    %p85 = scmp.eq.s32.totalorder %s16, 1
    %p86 = por %p84, %p85
    %p88 = scmp.ne.s32.totalorder %s73, %s87
    %p89 = scmp.eq.s32.totalorder %s16, 0
    %p90 = por %p88, %p89
    %s92 = sadd.s32 %s91, 1
    %p95 = scmp.eq.s32.totalorder %s10, 1
    %p96 = scmp.ne.s32.totalorder %s91, %s93
    %p97 = scmp.eq.s32.totalorder %s10, 0
    %p98 = por %p96, %p97
    %p99 = scmp.ne.s32.totalorder %s91, %s93
    %p100 = scmp.eq.s32.totalorder %s15, 1
    %p101 = por %p99, %p100
    %p102 = scmp.ne.s32.totalorder %s93, %s94
    %p103 = scmp.eq.s32.totalorder %s15, 0
    %p104 = por %p102, %p103
    %p105 = scmp.ne.s32.totalorder %s93, %s94
    %p106 = scmp.eq.s32.totalorder %s16, 1
    %p107 = por %p105, %p106
    %p109 = scmp.ne.s32.totalorder %s94, %s108
    %p110 = scmp.eq.s32.totalorder %s16, 0
    %p111 = por %p109, %p110
    %s112 = ssub.s32 %s10, %s17
    %p113 = scmp.eq.s32.totalorder %s112, 0
    %s115 = sadd.s32 %s114, 1
    %s116 = scalar_select %p113, %s114, %s115
    %p119 = pneg %p113
    %p120 = scmp.eq.s32.totalorder %s10, 1
    %p121 = por %p119, %p120
    %p122 = scmp.ne.s32.totalorder %s114, %s117
    %p123 = scmp.eq.s32.totalorder %s10, 0
    %p124 = por %p122, %p123
    %p125 = scmp.ne.s32.totalorder %s114, %s117
    %p126 = scmp.eq.s32.totalorder %s15, 1
    %p127 = por %p125, %p126
    %p128 = scmp.ne.s32.totalorder %s117, %s118
    %p129 = scmp.eq.s32.totalorder %s15, 0
    %p130 = por %p128, %p129
    %p131 = scmp.ne.s32.totalorder %s117, %s118
    %p132 = scmp.eq.s32.totalorder %s16, 1
    %p133 = por %p131, %p132
    %p135 = scmp.ne.s32.totalorder %s118, %s134
    %p136 = scmp.eq.s32.totalorder %s16, 0
    %p137 = por %p135, %p136
    %p138 = scmp.le.s32.totalorder 1, %s10
    %p139 = scmp.lt.s32.totalorder %s10, 3
    %p140 = pnand %p138, %p139
    %p141 = pneg %p140
    // Predicated region
    $region9: #{tpu_custom_call.1} parent=5 // pred_check
      _
    $region10: #{tpu_custom_call.1} parent=5 // pred_check_branch
      %143 = sbr.rel (%p140) target = $region12
    $region11: #{tpu_custom_call.1} parent=5 // pred_region
      %s144 = ssub.s32 %s10, 1
      // Predicated region
      $region13: #{tpu_custom_call.1} parent=11 // pred_check
        %p145 = pneg %p83
      $region14: #{tpu_custom_call.1} parent=11 // pred_check_branch
        %147 = sbr.rel (%p145) target = $region16
      $region15: #{tpu_custom_call.1} parent=11 // pred_region
        _
      $region16: #{tpu_custom_call.1} parent=11 // pred_fallthru
        _
      // Predicated region
      $region17: #{tpu_custom_call.1} parent=11 // pred_check
        %p148 = pneg %p104
      $region18: #{tpu_custom_call.1} parent=11 // pred_check_branch
        %150 = sbr.rel (%p148) target = $region20
      $region19: #{tpu_custom_call.1} parent=11 // pred_region
        _
      $region20: #{tpu_custom_call.1} parent=11 // pred_fallthru
        _
    $region12: #{tpu_custom_call.1} parent=5 // pred_fallthru
      _
    %p151 = scmp.lt.s32.totalorder %s10, 2
    // Predicated region
    $region21: #{tpu_custom_call.1} parent=5 // pred_check
      %p152 = pneg %p151
    $region22: #{tpu_custom_call.1} parent=5 // pred_check_branch
      %154 = sbr.rel (%p152) target = $region24
    $region23: #{tpu_custom_call.1} parent=5 // pred_region
      // Predicated region
      $region25: #{tpu_custom_call.1} parent=23 // pred_check
        %p155 = pneg %p30
      $region26: #{tpu_custom_call.1} parent=23 // pred_check_branch
        %157 = sbr.rel (%p155) target = $region28
      $region27: #{tpu_custom_call.1} parent=23 // pred_region
        %p158 = scmp.lt.s32.totalorder %s10, 1
        %s159 = scalar_select %p158, %s10, 1
        %s160 = smul.addr %s159, 8
        %s161 = scalar_lea.vmem %s0, %s160
      $region28: #{tpu_custom_call.1} parent=23 // pred_fallthru
        _
      // Predicated region
      $region29: #{tpu_custom_call.1} parent=23 // pred_check
        %p162 = pneg %p56
      $region30: #{tpu_custom_call.1} parent=23 // pred_check_branch
        %164 = sbr.rel (%p162) target = $region32
      $region31: #{tpu_custom_call.1} parent=23 // pred_region
        %p165 = scmp.lt.s32.totalorder %s10, 1
        %s166 = scalar_select %p165, %s10, 1
        %s167 = smul.addr %s166, 8
        %s168 = scalar_lea.vmem %s1, %s167
      $region32: #{tpu_custom_call.1} parent=23 // pred_fallthru
        _
    $region24: #{tpu_custom_call.1} parent=5 // pred_fallthru
      _
    %p169 = scmp.le.s32.totalorder 1, %s10
    %p170 = scmp.lt.s32.totalorder %s10, 3
    %p171 = pnand %p169, %p170
    %p172 = pneg %p171
    // Predicated region
    $region33: #{tpu_custom_call.1} parent=5 // pred_check
      _
    $region34: #{tpu_custom_call.1} parent=5 // pred_check_branch
      %174 = sbr.rel (%p171) target = $region36
    $region35: #{tpu_custom_call.1} parent=5 // pred_region
      %s175 = ssub.s32 %s10, 1
      %p176 = scmp.lt.s32.totalorder %s15, 1
      %s177 = scalar_select %p176, %s15, 1
      %s178 = smul.addr %s177, 8
      %s179 = scalar_lea.vmem %s0, %s178
      %p180 = pneg %p36
      %p181 = pneg %p33
      %p182 = scmp.lt.s32.totalorder %s15, 1
      %s183 = scalar_select %p182, %s15, 1
      %s184 = smul.addr %s183, 8
      %s185 = scalar_lea.vmem %s1, %s184
      %p186 = pneg %p62
      %p187 = pneg %p59
      %p188 = pneg %p83
      %p189 = pneg %p80
      %p190 = pneg %p104
      %p191 = pneg %p101
      %p192 = pneg %p130
      %p193 = pneg %p127
      %p194 = scmp.lt.s32.totalorder %s15, 1
      %s195 = scalar_select %p194, %s15, 1
      %s196 = smul.addr %s195, 8
      %s197 = scalar_lea.vmem %s4, %s196
      %p198 = scmp.lt.s32.totalorder %s15, 1
      %s199 = scalar_select %p198, %s15, 1
      %s200 = smul.addr %s199, 8
      %s201 = scalar_lea.vmem %s0, %s200
      %p202 = scmp.lt.s32.totalorder %s15, 1
      %s203 = scalar_select %p202, %s15, 1
      %s204 = smul.addr %s203, 8
      %s205 = scalar_lea.vmem %s1, %s204
      %p206 = scmp.lt.s32.totalorder %s15, 1
      %s207 = scalar_select %p206, %s15, 1
      %s208 = smul.addr %s207, 8
      %s209 = scalar_lea.vmem %s4, %s208
      %v210 = vld [vmem:[%s201] sm:$0xff]
      %vm211 = vcmask 64512
      %v212 = vsel %vm211, %v210, -inf
      %213 = vmax.xlane.f32.xlu0 %v212
      %v214 = vpop.xlane.xlu0 %213
      %v215 = vsub.f32 %v210, %v214
      %v216 = vmul.f32 %v215, 1.442695
      %v217 = vpow.pop %v216
      %v218 = vld [vmem:[%s2] sm:$0xf]
      %v219 = vunpack.c.l.bf16 %v218
      %v221 = vsel %vm211, %v217, 0
      %223 = vmatprep.subr.mxu0 0.0
      %224 = vmatpush1.msra.mxu0 0.0
      %225 = vmatprep.subr.mxu0 0.0
      %226 = vmatpush1.msra.mxu0 0.0
      %227 = vmatprep.subr.mxu0 0.0
      %228 = vmatpush1.msra.mxu0 0.0
      %229 = vmatprep.subr.mxu0 0.0
      %230 = vmatpush1.msra.mxu0 0.0
      %231 = vmatprep.subr.mxu0 0.0
      %232 = vmatpush1.msra.mxu0 0.0
      %233 = vmatprep.subr.mxu0 0.0
      %234 = vmatpush1.msra.mxu0 0.0
      %235 = vmatprep.subr.mxu0 0.0
      %236 = vmatpush1.msra.mxu0 0.0
      %237 = vmatprep.subr.mxu0 0.0
      %238 = vmatpush1.msra.mxu0 0.0
      %239 = vmatprep.subr.mxu0 0.0
      %240 = vmatpush1.msra.mxu0 0.0
      %241 = vmatprep.subr.mxu0 0.0
      %242 = vmatpush1.msra.mxu0 0.0
      %243 = vmatprep.subr.mxu0 0.0
      %244 = vmatpush1.msra.mxu0 0.0
      %245 = vmatprep.subr.mxu0 0.0
      %246 = vmatpush1.msra.mxu0 0.0
      %247 = vmatprep.subr.mxu0 0.0
      %248 = vmatpush1.msra.mxu0 0.0
      %249 = vmatprep.subr.mxu0 0.0
      %250 = vmatpush1.msra.mxu0 0.0
      %251 = vmatprep.subr.mxu0 0.0
      %252 = vmatpush1.msra.mxu0 0.0
      %253 = vmatprep.subr.mxu0 0.0
      %254 = vmatpush1.msra.mxu0 %v219
      %255 = vmatprep.subr.mxu0 0.0
      %256 = vmatpush2.msra.mxu0 0.0
      %257 = vmatprep.subr.mxu0 0.0
      %258 = vmatpush2.msra.mxu0 0.0
      %259 = vmatprep.subr.mxu0 0.0
      %260 = vmatpush2.msra.mxu0 0.0
      %261 = vmatprep.subr.mxu0 0.0
      %262 = vmatpush2.msra.mxu0 0.0
      %263 = vmatprep.subr.mxu0 0.0
      %264 = vmatpush2.msra.mxu0 0.0
      %265 = vmatprep.subr.mxu0 0.0
      %266 = vmatpush2.msra.mxu0 0.0
      %267 = vmatprep.subr.mxu0 0.0
      %268 = vmatpush2.msra.mxu0 0.0
      %269 = vmatprep.subr.mxu0 0.0
      %270 = vmatpush2.msra.mxu0 0.0
      %271 = vmatprep.subr.mxu0 0.0
      %272 = vmatpush2.msra.mxu0 0.0
      %273 = vmatprep.subr.mxu0 0.0
      %274 = vmatpush2.msra.mxu0 0.0
      %275 = vmatprep.subr.mxu0 0.0
      %276 = vmatpush2.msra.mxu0 0.0
      %277 = vmatprep.subr.mxu0 0.0
      %278 = vmatpush2.msra.mxu0 0.0
      %279 = vmatprep.subr.mxu0 0.0
      %280 = vmatpush2.msra.mxu0 0.0
      %281 = vmatprep.subr.mxu0 0.0
      %282 = vmatpush2.msra.mxu0 0.0
      %283 = vmatprep.subr.mxu0 0.0
      %284 = vmatpush2.msra.mxu0 0.0
      %285 = vmatprep.subr.mxu0 0.0
      %286 = vmatpush2.msra.mxu0 0.0
      %287 = vmatprep.mubr.f32.mxu0 0.0
      %288 = vmatmul.mubr.f32.gmra.mxu0 %v221
      %v289 = vpop.f32.mrf.mxu0
      %v290 = vadd.f32 0.0, %v289
      %v291 = vpop.f32.mrf.mxu0
      %292 = vdwg.mxu0
      %v293 = vld [vmem:[%s205] sm:$0xff]
      %v294 = vlaneseq
      %v295 = vand.u32 %v294, 127
      %296 = vset.pattern.permute.xlu0 0
      %297 = vperm.xlu0 %296, %v293
      %v298 = vpop.permute.xlu0 %297
      %vm299 = vcmp.eq.s32.totalorder %v295, %v298
      %v300 = vsel %vm299, 1, 0
      %v301 = vcvt.s32.f32 %v300
      %v302 = vld [vmem:[%s3] sm:$0xff]
      %v304 = vsel %vm211, %v301, 0
      %306 = vmatprep.subr.mxu0 0.0
      %307 = vmatpush1.msra.mxu0 0.0
      %308 = vmatprep.subr.mxu0 0.0
      %309 = vmatpush1.msra.mxu0 0.0
      %310 = vmatprep.subr.mxu0 0.0
      %311 = vmatpush1.msra.mxu0 0.0
      %312 = vmatprep.subr.mxu0 0.0
      %313 = vmatpush1.msra.mxu0 0.0
      %314 = vmatprep.subr.mxu0 0.0
      %315 = vmatpush1.msra.mxu0 0.0
      %316 = vmatprep.subr.mxu0 0.0
      %317 = vmatpush1.msra.mxu0 0.0
      %318 = vmatprep.subr.mxu0 0.0
      %319 = vmatpush1.msra.mxu0 0.0
      %320 = vmatprep.subr.mxu0 0.0
      %321 = vmatpush1.msra.mxu0 0.0
      %322 = vmatprep.subr.mxu0 0.0
      %323 = vmatpush1.msra.mxu0 0.0
      %324 = vmatprep.subr.mxu0 0.0
      %325 = vmatpush1.msra.mxu0 0.0
      %326 = vmatprep.subr.mxu0 0.0
      %327 = vmatpush1.msra.mxu0 0.0
      %328 = vmatprep.subr.mxu0 0.0
      %329 = vmatpush1.msra.mxu0 0.0
      %330 = vmatprep.subr.mxu0 0.0
      %331 = vmatpush1.msra.mxu0 0.0
      %332 = vmatprep.subr.mxu0 0.0
      %333 = vmatpush1.msra.mxu0 0.0
      %334 = vmatprep.subr.mxu0 0.0
      %335 = vmatpush1.msra.mxu0 0.0
      %336 = vmatprep.subr.mxu0 0.0
      %337 = vmatpush1.msra.mxu0 %v302
      %338 = vmatprep.subr.mxu0 0.0
      %339 = vmatpush2.msra.mxu0 0.0
      %340 = vmatprep.subr.mxu0 0.0
      %341 = vmatpush2.msra.mxu0 0.0
      %342 = vmatprep.subr.mxu0 0.0
      %343 = vmatpush2.msra.mxu0 0.0
      %344 = vmatprep.subr.mxu0 0.0
      %345 = vmatpush2.msra.mxu0 0.0
      %346 = vmatprep.subr.mxu0 0.0
      %347 = vmatpush2.msra.mxu0 0.0
      %348 = vmatprep.subr.mxu0 0.0
      %349 = vmatpush2.msra.mxu0 0.0
      %350 = vmatprep.subr.mxu0 0.0
      %351 = vmatpush2.msra.mxu0 0.0
      %352 = vmatprep.subr.mxu0 0.0
      %353 = vmatpush2.msra.mxu0 0.0
      %354 = vmatprep.subr.mxu0 0.0
      %355 = vmatpush2.msra.mxu0 0.0
      %356 = vmatprep.subr.mxu0 0.0
      %357 = vmatpush2.msra.mxu0 0.0
      %358 = vmatprep.subr.mxu0 0.0
      %359 = vmatpush2.msra.mxu0 0.0
      %360 = vmatprep.subr.mxu0 0.0
      %361 = vmatpush2.msra.mxu0 0.0
      %362 = vmatprep.subr.mxu0 0.0
      %363 = vmatpush2.msra.mxu0 0.0
      %364 = vmatprep.subr.mxu0 0.0
      %365 = vmatpush2.msra.mxu0 0.0
      %366 = vmatprep.subr.mxu0 0.0
      %367 = vmatpush2.msra.mxu0 0.0
      %368 = vmatprep.subr.mxu0 0.0
      %369 = vmatpush2.msra.mxu0 0.0
      %370 = vmatprep.mubr.f32.mxu0 0.0
      %371 = vmatmul.mubr.f32.gmra.mxu0 %v304
      %v372 = vpop.f32.mrf.mxu0
      %v373 = vadd.f32 0.0, %v372
      %v374 = vpop.f32.mrf.mxu0
      %375 = vdwg.mxu0
      %v376 = vcvt.s32.f32 %v295
      %378 = vset.pattern.permute.xlu0 0
      %379 = vperm.xlu0 %378, %v373
      %v380 = vpop.permute.xlu0 %379
      %v382 = vsub.f32 %v376, %v380
      %v383 = vand.u32 2147483647, %v382
      %vm384 = vcmp.lt.f32.partialorder %v383, 0.5
      %v385 = vsel %vm384, %v290, 0.0
      %vm386 = vcmask 121856
      %v387 = vsel %vm386, %v385, 0.0
      %388 = vadd.xlane.f32.xlu0 %v387
      %v389 = vpop.xlane.xlu0 %388
      %390 = vset.pattern.permute.xlu0 3
      %391 = vperm.xlu0 %390, %v373
      %v392 = vpop.permute.xlu0 %391
      %v394 = vsub.f32 %v376, %v392
      %v395 = vand.u32 2147483647, %v394
      %vm396 = vcmp.lt.f32.partialorder %v395, 0.5
      %v397 = vsel %vm396, %v290, 0.0
      %v398 = vsel %vm386, %v397, 0.0
      %399 = vadd.xlane.f32.xlu0 %v398
      %v400 = vpop.xlane.xlu0 %399
      %vm401 = vcmp.gt.f32.partialorder %v389, 0.0
      %v402 = vsel %vm401, %v389, 1.0
      %vm403 = vcmp.gt.f32.partialorder %v400, 0.0
      %v404 = vsel %vm403, %v400, 1.0
      %vm405 = vcmp.ne.f32.partialorder %v389, 0.0
      %v406 = vlog2.pop %v404
      %v407 = vmul.f32 %v406, 0.6931472
      %v408 = vlog2.pop %v402
      %v409 = vmul.f32 %v408, 0.6931472
      %v410 = vsub.f32 %v407, %v409
      %v411 = vsel %vm405, %v410, 0.0
      %v412 = vmul.f32 %v373, %v411
      %v413 = vadd.f32 %v412, 0.0
      %414 = vset.pattern.permute.xlu0 1
      %415 = vperm.xlu0 %414, %v373
      %v416 = vpop.permute.xlu0 %415
      %v418 = vsub.f32 %v376, %v416
      %v419 = vand.u32 2147483647, %v418
      %vm420 = vcmp.lt.f32.partialorder %v419, 0.5
      %v421 = vsel %vm420, %v290, 0.0
      %v422 = vsel %vm386, %v421, 0.0
      %423 = vadd.xlane.f32.xlu0 %v422
      %v424 = vpop.xlane.xlu0 %423
      %425 = vset.pattern.permute.xlu0 4
      %426 = vperm.xlu0 %425, %v373
      %v427 = vpop.permute.xlu0 %426
      %v429 = vsub.f32 %v376, %v427
      %v430 = vand.u32 2147483647, %v429
      %vm431 = vcmp.lt.f32.partialorder %v430, 0.5
      %v432 = vsel %vm431, %v290, 0.0
      %v433 = vsel %vm386, %v432, 0.0
      %434 = vadd.xlane.f32.xlu0 %v433
      %v435 = vpop.xlane.xlu0 %434
      %vm436 = vcmp.gt.f32.partialorder %v424, 0.0
      %v437 = vsel %vm436, %v424, 1.0
      %vm438 = vcmp.gt.f32.partialorder %v435, 0.0
      %v439 = vsel %vm438, %v435, 1.0
      %vm440 = vcmp.ne.f32.partialorder %v424, 0.0
      %v441 = vlog2.pop %v439
      %v442 = vmul.f32 %v441, 0.6931472
      %v443 = vlog2.pop %v437
      %v444 = vmul.f32 %v443, 0.6931472
      %v445 = vsub.f32 %v442, %v444
      %v446 = vsel %vm440, %v445, 0.0
      %v447 = vmul.f32 %v373, %v446
      %449 = vrot.lane.b32.xlu0 %v447, 127
      %v450 = vpop.permute.xlu0 %449
      %v452 = vadd.f32 %v413, %v450
      %453 = vset.pattern.permute.xlu0 2
      %454 = vperm.xlu0 %453, %v373
      %v455 = vpop.permute.xlu0 %454
      %v457 = vsub.f32 %v376, %v455
      %v458 = vand.u32 2147483647, %v457
      %vm459 = vcmp.lt.f32.partialorder %v458, 0.5
      %v460 = vsel %vm459, %v290, 0.0
      %v461 = vsel %vm386, %v460, 0.0
      %462 = vadd.xlane.f32.xlu0 %v461
      %v463 = vpop.xlane.xlu0 %462
      %464 = vset.pattern.permute.xlu0 5
      %465 = vperm.xlu0 %464, %v373
      %v466 = vpop.permute.xlu0 %465
      %v468 = vsub.f32 %v376, %v466
      %v469 = vand.u32 2147483647, %v468
      %vm470 = vcmp.lt.f32.partialorder %v469, 0.5
      %v471 = vsel %vm470, %v290, 0.0
      %v472 = vsel %vm386, %v471, 0.0
      %473 = vadd.xlane.f32.xlu0 %v472
      %v474 = vpop.xlane.xlu0 %473
      %vm475 = vcmp.gt.f32.partialorder %v463, 0.0
      %v476 = vsel %vm475, %v463, 1.0
      %vm477 = vcmp.gt.f32.partialorder %v474, 0.0
      %v478 = vsel %vm477, %v474, 1.0
      %vm479 = vcmp.ne.f32.partialorder %v463, 0.0
      %v480 = vlog2.pop %v478
      %v481 = vmul.f32 %v480, 0.6931472
      %v482 = vlog2.pop %v476
      %v483 = vmul.f32 %v482, 0.6931472
      %v484 = vsub.f32 %v481, %v483
      %v485 = vsel %vm479, %v484, 0.0
      %v486 = vmul.f32 %v373, %v485
      %488 = vrot.lane.b32.xlu0 %v486, 126
      %v489 = vpop.permute.xlu0 %488
      %v491 = vadd.f32 %v452, %v489
      %493 = vrot.lane.b32.xlu0 %v491, 122
      %v494 = vpop.permute.xlu0 %493
      %vm496 = vcmask 7168
      %497 = vst.msk [vmem:[%s209] sm:$0xff] %vm496, %v494
      %p498 = scmp.lt.s32.totalorder %s15, 1
      %s499 = scalar_select %p498, %s15, 1
      %s500 = smul.addr %s499, 8
      %s501 = scalar_lea.vmem %s4, %s500
      // Predicated region
      $region37: #{tpu_custom_call.1} parent=35 // pred_check
        %p502 = pneg %p127
      $region38: #{tpu_custom_call.1} parent=35 // pred_check_branch
        %504 = sbr.rel (%p502) target = $region40
      $region39: #{tpu_custom_call.1} parent=35 // pred_region
        _
      $region40: #{tpu_custom_call.1} parent=35 // pred_fallthru
        _
    $region36: #{tpu_custom_call.1} parent=5 // pred_fallthru
      _
    %p505 = scmp.le.s32.totalorder 2, %s10
    // Predicated region
    $region41: #{tpu_custom_call.1} parent=5 // pred_check
      %p506 = pneg %p505
    $region42: #{tpu_custom_call.1} parent=5 // pred_check_branch
      %508 = sbr.rel (%p506) target = $region44
    $region43: #{tpu_custom_call.1} parent=5 // pred_region
      %s509 = ssub.s32 %s10, 2
      // Predicated region
      $region45: #{tpu_custom_call.1} parent=43 // pred_check
        %p510 = pneg %p133
      $region46: #{tpu_custom_call.1} parent=43 // pred_check_branch
        %512 = sbr.rel (%p510) target = $region48
      $region47: #{tpu_custom_call.1} parent=43 // pred_region
        %p513 = scmp.lt.s32.totalorder %s16, 1
        %s514 = scalar_select %p513, %s16, 1
        %s515 = smul.addr %s514, 8
        %s516 = scalar_lea.vmem %s4, %s515
      $region48: #{tpu_custom_call.1} parent=43 // pred_fallthru
        _
    $region44: #{tpu_custom_call.1} parent=5 // pred_fallthru
      _
  $region6: #{tpu_custom_call.1} parent=0 // loop_footer
    %s14 = sadd.s32 1, %s10
  $region7: #{tpu_custom_call.1} parent=0 // loop_footer_branch
    %9 = sbr.rel target = $region3
  $region8: #{tpu_custom_call.1} parent=0 // loop_exit
    _

</llo_original>
